<compile_context>
chip_gen: v6e
topology: v6e:2x2x1
jax: 0.10.0
libtpu: 0.0.40
codegen_flags: <defaults>
</compile_context>

<pallas_src>
import jax
import jax.numpy as jnp
from jax.experimental import pallas as pl
from jax.experimental.pallas import tpu as pltpu

INPUT_SIZE = 5      # len(features)
HIDDEN_SIZE = 16
OUTPUT_SIZE = 1

_LANE = 128
MAX_BATCH_TILE = 64 * 1024    # lanes per grid step; ~10 MB live VMEM -> safe on v5e/v6e/v7x


def _round_up(v, m):
    return -(-v // m) * m


def _default_tanh_dtype():
    # bf16 EUP exists on v6e/v7x; keep f32 tanh on v5e (and anything unknown).
    try:
        kind = jax.devices()[0].device_kind.lower()
    except Exception:
        return jnp.float32
    if "v6" in kind or "v7" in kind:
        return jnp.bfloat16
    return jnp.float32


def _make_kernel(tanh_dtype):
    def _rnn_fc_kernel(x_ref, wih_ref, b_ref, wfc_ref, bfc_ref, o_ref):
        # x_ref   : (INPUT_SIZE, TB)            batch on lanes -> lane-dense load
        # wih_ref : (HIDDEN_SIZE, INPUT_SIZE)   PyTorch W_ih (resident)
        # b_ref   : (HIDDEN_SIZE, 1) f32        b_ih + b_hh, folded in the wrapper
        # wfc_ref : (OUTPUT_SIZE, HIDDEN_SIZE)  PyTorch fc.weight (resident)
        # bfc_ref : (1, 1) in SMEM              fc.bias scalar
        # o_ref   : (OUTPUT_SIZE, TB) f32       lane-dense output tile
        pre = jnp.dot(wih_ref[...], x_ref[...],
                      preferred_element_type=jnp.float32) + b_ref[...]       # (H, TB) f32
        h = jnp.tanh(pre.astype(tanh_dtype))                                 # bf16 on v6e/v7x
        out = jnp.dot(wfc_ref[...], h.astype(wfc_ref.dtype),
                      preferred_element_type=jnp.float32) + bfc_ref[0, 0]
        o_ref[...] = out                                                     # (1, TB) f32
    return _rnn_fc_kernel


def rnn_model_forward_pallas(x, params, *, batch_tile=None,
                             stream_dtype=jnp.bfloat16, tanh_dtype=None):
    """x: (B, INPUT_SIZE) float32 -> (B, 1) float32, via the Pallas kernel."""
    w_ih, w_hh, b_ih, b_hh, w_fc, b_fc = params
    del w_hh  # multiplied by h0 == 0 in the PyTorch forward -> dead work, dropped.

    if tanh_dtype is None:
        tanh_dtype = _default_tanh_dtype()

    B = x.shape[0]
    if batch_tile is None:
        # >= 2 grid steps (keeps both TCs busy on v7x) with each step as large as the
        # VMEM budget allows, to amortize the ~0.35us per-grid-step pipeline overhead.
        tb = min(MAX_BATCH_TILE, max(_LANE, _round_up(pl.cdiv(B, 2), _LANE)))
    else:
        tb = max(_LANE, _round_up(batch_tile, _LANE))
    num_tiles = max(2, pl.cdiv(B, tb))
    bp = num_tiles * tb

    # Single fused transpose + cast + pad: one HBM pass (no zeros-init + scatter).
    # TODO(synk): have the upstream producer emit x already as (INPUT_SIZE, B) in
    # bfloat16 so this repack pass disappears entirely.
    xt = jnp.pad(x.T.astype(stream_dtype), ((0, 0), (0, bp - B)))

    b_comb = (b_ih + b_hh).astype(jnp.float32).reshape(HIDDEN_SIZE, 1)
    bfc = b_fc.astype(jnp.float32).reshape(1, 1)
    wih = w_ih.astype(stream_dtype)
    wfc = w_fc.astype(stream_dtype)

    itemsize = jnp.dtype(stream_dtype).itemsize
    cost = pl.CostEstimate(
        flops=2 * (HIDDEN_SIZE * INPUT_SIZE + OUTPUT_SIZE * HIDDEN_SIZE) * bp,
        transcendentals=HIDDEN_SIZE * bp,
        bytes_accessed=(INPUT_SIZE * bp * itemsize            # streamed x
                        + OUTPUT_SIZE * bp * 4                # streamed out
                        + (wih.size + wfc.size) * itemsize    # resident weights
                        + b_comb.size * 4 + 4),
    )

    out = pl.pallas_call(
        _make_kernel(tanh_dtype),
        out_shape=jax.ShapeDtypeStruct((OUTPUT_SIZE, bp), jnp.float32),
        grid=(num_tiles,),
        in_specs=[
            pl.BlockSpec((INPUT_SIZE, tb), lambda i: (0, i)),            # streamed x
            pl.BlockSpec((HIDDEN_SIZE, INPUT_SIZE), lambda i: (0, 0)),   # resident W_ih
            pl.BlockSpec((HIDDEN_SIZE, 1), lambda i: (0, 0)),            # resident bias
            pl.BlockSpec((OUTPUT_SIZE, HIDDEN_SIZE), lambda i: (0, 0)),  # resident W_fc
            pl.BlockSpec(memory_space=pltpu.MemorySpace.SMEM),           # fc bias scalar
        ],
        out_specs=pl.BlockSpec((OUTPUT_SIZE, tb), lambda i: (0, i)),
        compiler_params=pltpu.CompilerParams(
            dimension_semantics=("parallel",),        # batch tiles shard across TCs (v7x)
            vmem_limit_bytes=32 * 1024 * 1024,        # plenty for the ~10 MB working set
        ),
        cost_estimate=cost,
    )(xt, wih, b_comb, wfc, bfc)

    return out[0, :B][:, None]                        # (B, 1) float32


def _reference_forward(x, params):
    """Pure-JAX f32 reference of the original PyTorch math (incl. the dead W_hh term)."""
    w_ih, w_hh, b_ih, b_hh, w_fc, b_fc = params
    h0 = jnp.zeros((x.shape[0], HIDDEN_SIZE), jnp.float32)
    h1 = jnp.tanh(x @ w_ih.T + h0 @ w_hh.T + b_ih + b_hh)
    return h1 @ w_fc.T + b_fc


def rnn_model_forward(x, params, *, use_pallas=None, **kwargs):
    """Dispatcher.  Fused XLA does this 5->16->1 chain in one HBM pass, so the Pallas
    path (extra repack pass + launch) only wins at large B; benchmark per generation."""
    if use_pallas is None:
        use_pallas = x.shape[0] >= 32768
    if not use_pallas:
        return _reference_forward(x, params)
    return rnn_model_forward_pallas(x, params, **kwargs)


def init_params(key):
    """Deterministic init with PyTorch-native shapes:
       W_ih (H, I), W_hh (H, H), b_ih (H,), b_hh (H,), fc.weight (1, H), fc.bias (1,)."""
    k = jax.random.split(key, 6)
    bound = 1.0 / jnp.sqrt(HIDDEN_SIZE)
    w_ih = jax.random.uniform(k[0], (HIDDEN_SIZE, INPUT_SIZE), jnp.float32, -bound, bound)
    w_hh = jax.random.uniform(k[1], (HIDDEN_SIZE, HIDDEN_SIZE), jnp.float32, -bound, bound)
    b_ih = jax.random.uniform(k[2], (HIDDEN_SIZE,), jnp.float32, -bound, bound)
    b_hh = jax.random.uniform(k[3], (HIDDEN_SIZE,), jnp.float32, -bound, bound)
    w_fc = jax.random.uniform(k[4], (OUTPUT_SIZE, HIDDEN_SIZE), jnp.float32, -bound, bound)
    b_fc = jax.random.uniform(k[5], (OUTPUT_SIZE,), jnp.float32, -bound, bound)
    return (w_ih, w_hh, b_ih, b_hh, w_fc, b_fc)


if __name__ == "__main__":
    key = jax.random.PRNGKey(0)
    pkey, xkey1, xkey2 = jax.random.split(key, 3)
    params = init_params(pkey)

    # Small batch (as in the training script); Pallas path exercised directly.
    x_small = jax.random.normal(xkey1, (8, INPUT_SIZE), jnp.float32)
    ref_small = _reference_forward(x_small, params)

    # (a) Bit-tight check of the kernel math: f32 streaming + f32 tanh.
    out_f32 = jax.block_until_ready(rnn_model_forward_pallas(
        x_small, params, stream_dtype=jnp.float32, tanh_dtype=jnp.float32))
    assert out_f32.shape == (8, OUTPUT_SIZE)
    assert jnp.allclose(out_f32, ref_small, atol=1e-5, rtol=1e-5)

    # (b) Default fast path: bf16 streaming (+ bf16 tanh on v6e/v7x) -> looser tolerance.
    out_bf16 = jax.block_until_ready(rnn_model_forward_pallas(x_small, params))
    assert out_bf16.shape == (8, OUTPUT_SIZE)
    assert jnp.allclose(out_bf16, ref_small, atol=5e-2, rtol=5e-2)

    # (c) Ragged batch forcing a multi-step pipelined grid (batch_tile=128 -> 3 tiles).
    x_big = jax.random.normal(xkey2, (300, INPUT_SIZE), jnp.float32)
    ref_big = _reference_forward(x_big, params)
    out_big = jax.block_until_ready(rnn_model_forward_pallas(
        x_big, params, batch_tile=128, stream_dtype=jnp.float32, tanh_dtype=jnp.float32))
    assert out_big.shape == (300, OUTPUT_SIZE)
    assert jnp.allclose(out_big, ref_big, atol=1e-5, rtol=1e-5)

    print("KERNEL_OK")
</pallas_src>

<mosaic_0001>
module attributes {stable_mosaic.version = 11 : i64} {
  func.func @_rnn_fc_kernel(%arg0: i32, %arg1: memref<5x128xf32, #tpu.memory_space<vmem>>, %arg2: memref<16x5xf32, #tpu.memory_space<vmem>>, %arg3: memref<16x1xf32, #tpu.memory_space<vmem>>, %arg4: memref<1x16xf32, #tpu.memory_space<vmem>>, %arg5: memref<1x1xf32, #tpu.memory_space<smem>>, %arg6: memref<1x128xf32, #tpu.memory_space<vmem>>) attributes {dimension_semantics = [#tpu.dimension_semantics<parallel>], iteration_bounds = array<i64: 2>, scalar_prefetch = 0 : i64, scratch_operands = 0 : i64, tpu.core_type = #tpu.core_type<tc>, window_params = [{transform_indices = @transform_0, window_bounds = array<i64: 5, 128>}, {pipeline_mode = #tpu.pipeline_mode<synchronous>, transform_indices = @transform_1, window_bounds = array<i64: 16, 5>}, {pipeline_mode = #tpu.pipeline_mode<synchronous>, transform_indices = @transform_2, window_bounds = array<i64: 16, 1>}, {pipeline_mode = #tpu.pipeline_mode<synchronous>, transform_indices = @transform_3, window_bounds = array<i64: 1, 16>}, {transform_indices = @transform_4, window_bounds = array<i64: 1, 1>}, {transform_indices = @transform_5, window_bounds = array<i64: 1, 128>}]} {
    %c0 = arith.constant 0 : index
    %c0_0 = arith.constant 0 : index
    %0 = vector.load %arg2[%c0, %c0_0] : memref<16x5xf32, #tpu.memory_space<vmem>>, vector<16x5xf32>
    %c0_1 = arith.constant 0 : index
    %c0_2 = arith.constant 0 : index
    %1 = vector.load %arg1[%c0_1, %c0_2] : memref<5x128xf32, #tpu.memory_space<vmem>>, vector<5x128xf32>
    %cst = arith.constant dense<0.000000e+00> : vector<16x128xf32>
    %2 = tpu.matmul %0, %1, %cst {dimension_numbers = #tpu.dot_dimension_numbers<[1], [0], [0], [1], [0, 0, 1, 1], [], []>} : vector<16x5xf32>, vector<5x128xf32>, vector<16x128xf32> -> vector<16x128xf32>
    %c0_3 = arith.constant 0 : index
    %c0_4 = arith.constant 0 : index
    %3 = vector.load %arg3[%c0_3, %c0_4] : memref<16x1xf32, #tpu.memory_space<vmem>>, vector<16x1xf32>
    %4 = vector.broadcast %3 : vector<16x1xf32> to vector<16x128xf32>
    %5 = arith.addf %2, %4 : vector<16x128xf32>
    %6 = math.tanh %5 : vector<16x128xf32>
    %c0_5 = arith.constant 0 : index
    %c0_6 = arith.constant 0 : index
    %7 = vector.load %arg4[%c0_5, %c0_6] : memref<1x16xf32, #tpu.memory_space<vmem>>, vector<1x16xf32>
    %cst_7 = arith.constant dense<0.000000e+00> : vector<1x128xf32>
    %8 = tpu.matmul %7, %6, %cst_7 {dimension_numbers = #tpu.dot_dimension_numbers<[1], [0], [0], [1], [0, 0, 1, 1], [], []>} : vector<1x16xf32>, vector<16x128xf32>, vector<1x128xf32> -> vector<1x128xf32>
    %c0_8 = arith.constant 0 : index
    %c0_9 = arith.constant 0 : index
    %9 = memref.load %arg5[%c0_8, %c0_9] : memref<1x1xf32, #tpu.memory_space<smem>>
    %10 = vector.broadcast %9 : f32 to vector<1x128xf32>
    %11 = arith.addf %8, %10 : vector<1x128xf32>
    %c0_10 = arith.constant 0 : index
    %c0_11 = arith.constant 0 : index
    %12 = vector.load %arg6[%c0_10, %c0_11] : memref<1x128xf32, #tpu.memory_space<vmem>>, vector<1x128xf32>
    tpu.vector_store %arg6[%c0_10, %c0_11], %11 {strides = array<i32>} : memref<1x128xf32, #tpu.memory_space<vmem>>, vector<1x128xf32>,
    return
  }
  func.func @transform_0(%arg0: i32) -> (i32, i32) {
    %c0_i32 = arith.constant 0 : i32
    %c0_i32_0 = arith.constant 0 : i32
    return %c0_i32, %arg0 : i32, i32
  }
  func.func @transform_1(%arg0: i32) -> (i32, i32) {
    %c0_i32 = arith.constant 0 : i32
    %c0_i32_0 = arith.constant 0 : i32
    %c0_i32_1 = arith.constant 0 : i32
    return %c0_i32, %c0_i32_0 : i32, i32
  }
  func.func @transform_2(%arg0: i32) -> (i32, i32) {
    %c0_i32 = arith.constant 0 : i32
    %c0_i32_0 = arith.constant 0 : i32
    %c0_i32_1 = arith.constant 0 : i32
    return %c0_i32, %c0_i32_0 : i32, i32
  }
  func.func @transform_3(%arg0: i32) -> (i32, i32) {
    %c0_i32 = arith.constant 0 : i32
    %c0_i32_0 = arith.constant 0 : i32
    %c0_i32_1 = arith.constant 0 : i32
    return %c0_i32, %c0_i32_0 : i32, i32
  }
  func.func @transform_4(%arg0: i32) -> (i32, i32) {
    %c0_i32 = arith.constant 0 : i32
    %c0_i32_0 = arith.constant 0 : i32
    %c0_i32_1 = arith.constant 0 : i32
    return %c0_i32, %c0_i32_0 : i32, i32
  }
  func.func @transform_5(%arg0: i32) -> (i32, i32) {
    %c0_i32 = arith.constant 0 : i32
    %c0_i32_0 = arith.constant 0 : i32
    return %c0_i32, %arg0 : i32, i32
  }
}

</mosaic_0001>

<llo_original>
// kernel: tpu_custom_call.1
$region0: #{tpu_custom_call.1}
  #allocation0 [shape = 'u32[]', space=smem, size = 0x4, offset = 0x4, fixed_abs, tag = 'smem constant byte address 0x4 - core index']
  #allocation1 [shape = 'u32[144,128]{1,0:T(1,128)}', space=vmem, size = 0x12000, scoped, tag = 'internal scratch']
  #allocation2 [shape = 'f32[1,1]{1,0:T(1,128)S(6)}', space=smem, size = 0x200, scoped, tag = 'scoped memory for tpu_custom_call.1']
  %s0 = inlined_call_operand.vmem [shape: f32[5,256], index: 0, kind: input, shape index: {}]
  %s1 = inlined_call_operand.vmem [shape: f32[16,5], index: 1, kind: input, shape index: {}]
  %s2 = inlined_call_operand.vmem [shape: f32[16,1], index: 2, kind: input, shape index: {}]
  %s3 = inlined_call_operand.vmem [shape: f32[1,16], index: 3, kind: input, shape index: {}]
  %s4 = inlined_call_operand.<no memory space> [shape: f32[1,1], index: 4, kind: input, shape index: {}]
  %s5 = inlined_call_operand.hbm [shape: f32[1,256], index: 5, kind: output, shape index: {}]
  %s6 = sld [smem:[#allocation0]]
  $region53: #{tpu_custom_call.1} parent=0
    _
  %s8 = ssub.s32 1, %s6
  %s9 = scalar_select 0, %s8, %s6
  %10 = sst [smem:[#allocation2]] %s4
  $region1: #{tpu_custom_call.1} parent=0
    #allocation3 [shape = 'u8[1024]{0}', space=vmem, size = 0x400, scoped, tag = 'output window, operand 0']
    #allocation4 [shape = 's32[2]{0}', space=sflag, size = 0x8, scoped, tag = 'scoped memory for tpu_custom_call.1']
    %11 = vsyncpa [#allocation4], 0
    %s12 = scalar_lea.sflag [#allocation4], 1
    %13 = vsyncpa %s12, 0
    loop: start=0, step=1, limit=4
    $region2: #{tpu_custom_call.1} parent=1 // loop_pre_header
      _
    $region3: #{tpu_custom_call.1} parent=1 // loop_header
      %s15 = sphi 0, %s19
      %p16 = scmp.ge.s32.totalorder %s15, 4
      %s25 = sphi 0, %s27
      %s28 = sphi 0, %s25
      %s29 = sphi 0, %s28
      %s45 = sphi 0, %s29
      %s49 = sphi 0, %s49
      %s51 = sphi 0, %s49
      %s52 = sphi 0, %s51
      %s66 = sphi 0, %s52
      %s70 = sphi 0, %s70
      %s72 = sphi 0, %s70
      %s73 = sphi 0, %s72
      %s87 = sphi 0, %s73
      %s91 = sphi 0, %s91
      %s93 = sphi 0, %s91
      %s94 = sphi 0, %s93
      %s108 = sphi 0, %s94
      %s112 = sphi 0, %s112
      %s114 = sphi 0, %s112
      %s115 = sphi 0, %s114
      %s129 = sphi 0, %s115
      %s135 = sphi 0, %s137
      %s138 = sphi 0, %s135
      %s139 = sphi 0, %s138
      %s155 = sphi 0, %s139
    $region4: #{tpu_custom_call.1} parent=1 // loop_header_branch
      %18 = sbr.rel (%p16) target = $region8
    $region5: #{tpu_custom_call.1} parent=1 // loop_body
      %s20 = ssub.s32 %s15, 1
      %s21 = ssub.s32 %s15, 2
      %s22 = sadd.s32 %s15, 1
      %s23 = ssub.s32 %s15, %s22
      %p24 = scmp.eq.s32.totalorder %s23, 0
      %s26 = sadd.s32 %s25, 1
      %s27 = scalar_select %p24, %s25, %s26
      %p30 = pneg %p24
      %p31 = scmp.eq.s32.totalorder %s15, 1
      %p32 = por %p30, %p31
      %p33 = scmp.ne.s32.totalorder %s25, %s28
      %p34 = scmp.eq.s32.totalorder %s15, 0
      %p35 = por %p33, %p34
      %p36 = scmp.ne.s32.totalorder %s25, %s28
      %p37 = scmp.eq.s32.totalorder %s20, 1
      %p38 = por %p36, %p37
      %p39 = scmp.ne.s32.totalorder %s28, %s29
      %p40 = scmp.eq.s32.totalorder %s20, 0
      %p41 = por %p39, %p40
      %p42 = scmp.ne.s32.totalorder %s28, %s29
      %p43 = scmp.eq.s32.totalorder %s21, 1
      %p44 = por %p42, %p43
      %p46 = scmp.ne.s32.totalorder %s29, %s45
      %p47 = scmp.eq.s32.totalorder %s21, 0
      %p48 = por %p46, %p47
      %s50 = sadd.s32 %s49, 1
      %p53 = scmp.eq.s32.totalorder %s15, 1
      %p54 = scmp.ne.s32.totalorder %s49, %s51
      %p55 = scmp.eq.s32.totalorder %s15, 0
      %p56 = por %p54, %p55
      %p57 = scmp.ne.s32.totalorder %s49, %s51
      %p58 = scmp.eq.s32.totalorder %s20, 1
      %p59 = por %p57, %p58
      %p60 = scmp.ne.s32.totalorder %s51, %s52
      %p61 = scmp.eq.s32.totalorder %s20, 0
      %p62 = por %p60, %p61
      %p63 = scmp.ne.s32.totalorder %s51, %s52
      %p64 = scmp.eq.s32.totalorder %s21, 1
      %p65 = por %p63, %p64
      %p67 = scmp.ne.s32.totalorder %s52, %s66
      %p68 = scmp.eq.s32.totalorder %s21, 0
      %p69 = por %p67, %p68
      %s71 = sadd.s32 %s70, 1
      %p74 = scmp.eq.s32.totalorder %s15, 1
      %p75 = scmp.ne.s32.totalorder %s70, %s72
      %p76 = scmp.eq.s32.totalorder %s15, 0
      %p77 = por %p75, %p76
      %p78 = scmp.ne.s32.totalorder %s70, %s72
      %p79 = scmp.eq.s32.totalorder %s20, 1
      %p80 = por %p78, %p79
      %p81 = scmp.ne.s32.totalorder %s72, %s73
      %p82 = scmp.eq.s32.totalorder %s20, 0
      %p83 = por %p81, %p82
      %p84 = scmp.ne.s32.totalorder %s72, %s73
      %p85 = scmp.eq.s32.totalorder %s21, 1
      %p86 = por %p84, %p85
      %p88 = scmp.ne.s32.totalorder %s73, %s87
      %p89 = scmp.eq.s32.totalorder %s21, 0
      %p90 = por %p88, %p89
      %s92 = sadd.s32 %s91, 1
      %p95 = scmp.eq.s32.totalorder %s15, 1
      %p96 = scmp.ne.s32.totalorder %s91, %s93
      %p97 = scmp.eq.s32.totalorder %s15, 0
      %p98 = por %p96, %p97
      %p99 = scmp.ne.s32.totalorder %s91, %s93
      %p100 = scmp.eq.s32.totalorder %s20, 1
      %p101 = por %p99, %p100
      %p102 = scmp.ne.s32.totalorder %s93, %s94
      %p103 = scmp.eq.s32.totalorder %s20, 0
      %p104 = por %p102, %p103
      %p105 = scmp.ne.s32.totalorder %s93, %s94
      %p106 = scmp.eq.s32.totalorder %s21, 1
      %p107 = por %p105, %p106
      %p109 = scmp.ne.s32.totalorder %s94, %s108
      %p110 = scmp.eq.s32.totalorder %s21, 0
      %p111 = por %p109, %p110
      %s113 = sadd.s32 %s112, 1
      %p116 = scmp.eq.s32.totalorder %s15, 1
      %p117 = scmp.ne.s32.totalorder %s112, %s114
      %p118 = scmp.eq.s32.totalorder %s15, 0
      %p119 = por %p117, %p118
      %p120 = scmp.ne.s32.totalorder %s112, %s114
      %p121 = scmp.eq.s32.totalorder %s20, 1
      %p122 = por %p120, %p121
      %p123 = scmp.ne.s32.totalorder %s114, %s115
      %p124 = scmp.eq.s32.totalorder %s20, 0
      %p125 = por %p123, %p124
      %p126 = scmp.ne.s32.totalorder %s114, %s115
      %p127 = scmp.eq.s32.totalorder %s21, 1
      %p128 = por %p126, %p127
      %p130 = scmp.ne.s32.totalorder %s115, %s129
      %p131 = scmp.eq.s32.totalorder %s21, 0
      %p132 = por %p130, %p131
      %s133 = ssub.s32 %s15, %s22
      %p134 = scmp.eq.s32.totalorder %s133, 0
      %s136 = sadd.s32 %s135, 1
      %s137 = scalar_select %p134, %s135, %s136
      %p140 = pneg %p134
      %p141 = scmp.eq.s32.totalorder %s15, 1
      %p142 = por %p140, %p141
      %p143 = scmp.ne.s32.totalorder %s135, %s138
      %p144 = scmp.eq.s32.totalorder %s15, 0
      %p145 = por %p143, %p144
      %p146 = scmp.ne.s32.totalorder %s135, %s138
      %p147 = scmp.eq.s32.totalorder %s20, 1
      %p148 = por %p146, %p147
      %p149 = scmp.ne.s32.totalorder %s138, %s139
      %p150 = scmp.eq.s32.totalorder %s20, 0
      %p151 = por %p149, %p150
      %p152 = scmp.ne.s32.totalorder %s138, %s139
      %p153 = scmp.eq.s32.totalorder %s21, 1
      %p154 = por %p152, %p153
      %p156 = scmp.ne.s32.totalorder %s139, %s155
      %p157 = scmp.eq.s32.totalorder %s21, 0
      %p158 = por %p156, %p157
      %p159 = scmp.le.s32.totalorder 1, %s15
      %p160 = scmp.lt.s32.totalorder %s15, 3
      %p161 = pnand %p159, %p160
      %p162 = pneg %p161
      // Predicated region
      $region9: #{tpu_custom_call.1} parent=5 // pred_check
        _
      $region10: #{tpu_custom_call.1} parent=5 // pred_check_branch
        %164 = sbr.rel (%p161) target = $region12
      $region11: #{tpu_custom_call.1} parent=5 // pred_region
        %s165 = ssub.s32 %s15, 1
        // Predicated region
        $region13: #{tpu_custom_call.1} parent=11 // pred_check
          %p166 = pneg %p62
        $region14: #{tpu_custom_call.1} parent=11 // pred_check_branch
          %168 = sbr.rel (%p166) target = $region16
        $region15: #{tpu_custom_call.1} parent=11 // pred_region
          _
        $region16: #{tpu_custom_call.1} parent=11 // pred_fallthru
          _
        // Predicated region
        $region17: #{tpu_custom_call.1} parent=11 // pred_check
          %p169 = pneg %p83
        $region18: #{tpu_custom_call.1} parent=11 // pred_check_branch
          %171 = sbr.rel (%p169) target = $region20
        $region19: #{tpu_custom_call.1} parent=11 // pred_region
          _
        $region20: #{tpu_custom_call.1} parent=11 // pred_fallthru
          _
        // Predicated region
        $region21: #{tpu_custom_call.1} parent=11 // pred_check
          %p172 = pneg %p104
        $region22: #{tpu_custom_call.1} parent=11 // pred_check_branch
          %174 = sbr.rel (%p172) target = $region24
        $region23: #{tpu_custom_call.1} parent=11 // pred_region
          _
        $region24: #{tpu_custom_call.1} parent=11 // pred_fallthru
          _
        // Predicated region
        $region25: #{tpu_custom_call.1} parent=11 // pred_check
          %p175 = pneg %p125
        $region26: #{tpu_custom_call.1} parent=11 // pred_check_branch
          %177 = sbr.rel (%p175) target = $region28
        $region27: #{tpu_custom_call.1} parent=11 // pred_region
          _
        $region28: #{tpu_custom_call.1} parent=11 // pred_fallthru
          _
      $region12: #{tpu_custom_call.1} parent=5 // pred_fallthru
        _
      %p178 = scmp.lt.s32.totalorder %s15, 2
      // Predicated region
      $region29: #{tpu_custom_call.1} parent=5 // pred_check
        %p179 = pneg %p178
      $region30: #{tpu_custom_call.1} parent=5 // pred_check_branch
        %181 = sbr.rel (%p179) target = $region32
      $region31: #{tpu_custom_call.1} parent=5 // pred_region
        // Predicated region
        $region33: #{tpu_custom_call.1} parent=31 // pred_check
          %p182 = pneg %p35
        $region34: #{tpu_custom_call.1} parent=31 // pred_check_branch
          %184 = sbr.rel (%p182) target = $region36
        $region35: #{tpu_custom_call.1} parent=31 // pred_region
          %p185 = scmp.lt.s32.totalorder %s15, 1
          %s186 = scalar_select %p185, %s15, 1
          %s187 = smul.addr %s186, 8
          %s188 = scalar_lea.vmem %s0, %s187
        $region36: #{tpu_custom_call.1} parent=31 // pred_fallthru
          _
      $region32: #{tpu_custom_call.1} parent=5 // pred_fallthru
        _
      %p189 = scmp.le.s32.totalorder 1, %s15
      %p190 = scmp.lt.s32.totalorder %s15, 3
      %p191 = pnand %p189, %p190
      %p192 = pneg %p191
      // Predicated region
      $region37: #{tpu_custom_call.1} parent=5 // pred_check
        _
      $region38: #{tpu_custom_call.1} parent=5 // pred_check_branch
        %194 = sbr.rel (%p191) target = $region40
      $region39: #{tpu_custom_call.1} parent=5 // pred_region
        %s195 = ssub.s32 %s15, 1
        %p196 = scmp.lt.s32.totalorder %s20, 1
        %s197 = scalar_select %p196, %s20, 1
        %s198 = smul.addr %s197, 8
        %s199 = scalar_lea.vmem %s0, %s198
        %p200 = pneg %p41
        %p201 = pneg %p38
        %p202 = pneg %p62
        %p203 = pneg %p59
        %p204 = pneg %p83
        %p205 = pneg %p80
        %p206 = pneg %p104
        %p207 = pneg %p101
        %p208 = pneg %p125
        %p209 = pneg %p122
        %p210 = pneg %p151
        %p211 = pneg %p148
        %s212 = sand.u32 %s138, 1
        %s213 = scalar_lea.sflag [#allocation4], %s212
        %s214 = sand.u32 %s138, 1
        %s215 = scalar_lea.vmem [#allocation3], %s214
        %p216 = scmp.lt.s32.totalorder %s20, 1
        %s217 = scalar_select %p216, %s20, 1
        %s218 = smul.addr %s217, 8
        %s219 = scalar_lea.vmem %s0, %s218
        %v220 = vld [vmem:[%s1] sm:$0xff]
        %v221 = vld [vmem:[%s1 + $0x8] sm:$0xff]
        %v222 = vld [vmem:[%s219] sm:$0x1f]
        %v223 = vld [vmem:[%s2] sm:$0xff]
        %v224 = vld [vmem:[%s2 + $0x8] sm:$0xff]
        %226 = vset.pattern.permute.xlu0 0
        %227 = vperm.xlu0 %226, %v223
        %v228 = vpop.permute.xlu0 %227
        %231 = vset.pattern.permute.xlu0 0
        %232 = vperm.xlu0 %231, %v224
        %v233 = vpop.permute.xlu0 %232
        %vm235 = vcmask 39936
        %v237 = vsel %vm235, %v220, 0
        %v240 = vsel %vm235, %v221, 0
        %vm242 = vcmask 1044480
        %v244 = vsel %vm242, %v222, 0
        %246 = vmatprep.subr.mxu0 0.0
        %247 = vmatpush1.msra.mxu0 0.0
        %248 = vmatprep.subr.mxu0 0.0
        %249 = vmatpush1.msra.mxu0 0.0
        %250 = vmatprep.subr.mxu0 0.0
        %251 = vmatpush1.msra.mxu0 0.0
        %252 = vmatprep.subr.mxu0 0.0
        %253 = vmatpush1.msra.mxu0 0.0
        %254 = vmatprep.subr.mxu0 0.0
        %255 = vmatpush1.msra.mxu0 0.0
        %256 = vmatprep.subr.mxu0 0.0
        %257 = vmatpush1.msra.mxu0 0.0
        %258 = vmatprep.subr.mxu0 0.0
        %259 = vmatpush1.msra.mxu0 0.0
        %260 = vmatprep.subr.mxu0 0.0
        %261 = vmatpush1.msra.mxu0 0.0
        %262 = vmatprep.subr.mxu0 0.0
        %263 = vmatpush1.msra.mxu0 0.0
        %264 = vmatprep.subr.mxu0 0.0
        %265 = vmatpush1.msra.mxu0 0.0
        %266 = vmatprep.subr.mxu0 0.0
        %267 = vmatpush1.msra.mxu0 0.0
        %268 = vmatprep.subr.mxu0 0.0
        %269 = vmatpush1.msra.mxu0 0.0
        %270 = vmatprep.subr.mxu0 0.0
        %271 = vmatpush1.msra.mxu0 0.0
        %272 = vmatprep.subr.mxu0 0.0
        %273 = vmatpush1.msra.mxu0 0.0
        %274 = vmatprep.subr.mxu0 0.0
        %275 = vmatpush1.msra.mxu0 0.0
        %276 = vmatprep.subr.mxu0 0.0
        %277 = vmatpush1.msra.mxu0 %v244
        %278 = vmatprep.subr.mxu0 0.0
        %279 = vmatpush2.msra.mxu0 0.0
        %280 = vmatprep.subr.mxu0 0.0
        %281 = vmatpush2.msra.mxu0 0.0
        %282 = vmatprep.subr.mxu0 0.0
        %283 = vmatpush2.msra.mxu0 0.0
        %284 = vmatprep.subr.mxu0 0.0
        %285 = vmatpush2.msra.mxu0 0.0
        %286 = vmatprep.subr.mxu0 0.0
        %287 = vmatpush2.msra.mxu0 0.0
        %288 = vmatprep.subr.mxu0 0.0
        %289 = vmatpush2.msra.mxu0 0.0
        %290 = vmatprep.subr.mxu0 0.0
        %291 = vmatpush2.msra.mxu0 0.0
        %292 = vmatprep.subr.mxu0 0.0
        %293 = vmatpush2.msra.mxu0 0.0
        %294 = vmatprep.subr.mxu0 0.0
        %295 = vmatpush2.msra.mxu0 0.0
        %296 = vmatprep.subr.mxu0 0.0
        %297 = vmatpush2.msra.mxu0 0.0
        %298 = vmatprep.subr.mxu0 0.0
        %299 = vmatpush2.msra.mxu0 0.0
        %300 = vmatprep.subr.mxu0 0.0
        %301 = vmatpush2.msra.mxu0 0.0
        %302 = vmatprep.subr.mxu0 0.0
        %303 = vmatpush2.msra.mxu0 0.0
        %304 = vmatprep.subr.mxu0 0.0
        %305 = vmatpush2.msra.mxu0 0.0
        %306 = vmatprep.subr.mxu0 0.0
        %307 = vmatpush2.msra.mxu0 0.0
        %308 = vmatprep.subr.mxu0 0.0
        %309 = vmatpush2.msra.mxu0 0.0
        %310 = vmatprep.mubr.f32.mxu0 0.0
        %311 = vmatmul.mubr.f32.gmra.mxu0 %v237
        %v312 = vpop.f32.mrf.mxu0
        %v313 = vadd.f32 %v228, %v312
        %v314 = vpop.f32.mrf.mxu0
        %315 = vmatprep.mubr.f32.mxu0 0.0
        %316 = vmatmul.mubr.f32.gmra.mxu0 %v240
        %v317 = vpop.f32.mrf.mxu0
        %v318 = vadd.f32 %v233, %v317
        %v319 = vpop.f32.mrf.mxu0
        %320 = vdwg.mxu0
        %v321 = vtanh.pop %v313
        %v322 = vtanh.pop %v318
        %v323 = vld [vmem:[%s3] sm:$0x1]
        %s324 = sld [smem:[#allocation2]]
        %v325 = vstv %s324
        %vm326 = vcmask 130048
        %v328 = vsel %vm326, %v323, 0
        %330 = vmatprep.subr.mxu0 0.0
        %331 = vmatpush1.msra.mxu0 0.0
        %332 = vmatprep.subr.mxu0 0.0
        %333 = vmatpush1.msra.mxu0 0.0
        %334 = vmatprep.subr.mxu0 0.0
        %335 = vmatpush1.msra.mxu0 0.0
        %336 = vmatprep.subr.mxu0 0.0
        %337 = vmatpush1.msra.mxu0 0.0
        %338 = vmatprep.subr.mxu0 0.0
        %339 = vmatpush1.msra.mxu0 0.0
        %340 = vmatprep.subr.mxu0 0.0
        %341 = vmatpush1.msra.mxu0 0.0
        %342 = vmatprep.subr.mxu0 0.0
        %343 = vmatpush1.msra.mxu0 0.0
        %344 = vmatprep.subr.mxu0 0.0
        %345 = vmatpush1.msra.mxu0 0.0
        %346 = vmatprep.subr.mxu0 0.0
        %347 = vmatpush1.msra.mxu0 0.0
        %348 = vmatprep.subr.mxu0 0.0
        %349 = vmatpush1.msra.mxu0 0.0
        %350 = vmatprep.subr.mxu0 0.0
        %351 = vmatpush1.msra.mxu0 0.0
        %352 = vmatprep.subr.mxu0 0.0
        %353 = vmatpush1.msra.mxu0 0.0
        %354 = vmatprep.subr.mxu0 0.0
        %355 = vmatpush1.msra.mxu0 0.0
        %356 = vmatprep.subr.mxu0 0.0
        %357 = vmatpush1.msra.mxu0 0.0
        %358 = vmatprep.subr.mxu0 0.0
        %359 = vmatpush1.msra.mxu0 %v322
        %360 = vmatprep.subr.mxu0 0.0
        %361 = vmatpush1.msra.mxu0 %v321
        %362 = vmatprep.subr.mxu0 0.0
        %363 = vmatpush2.msra.mxu0 0.0
        %364 = vmatprep.subr.mxu0 0.0
        %365 = vmatpush2.msra.mxu0 0.0
        %366 = vmatprep.subr.mxu0 0.0
        %367 = vmatpush2.msra.mxu0 0.0
        %368 = vmatprep.subr.mxu0 0.0
        %369 = vmatpush2.msra.mxu0 0.0
        %370 = vmatprep.subr.mxu0 0.0
        %371 = vmatpush2.msra.mxu0 0.0
        %372 = vmatprep.subr.mxu0 0.0
        %373 = vmatpush2.msra.mxu0 0.0
        %374 = vmatprep.subr.mxu0 0.0
        %375 = vmatpush2.msra.mxu0 0.0
        %376 = vmatprep.subr.mxu0 0.0
        %377 = vmatpush2.msra.mxu0 0.0
        %378 = vmatprep.subr.mxu0 0.0
        %379 = vmatpush2.msra.mxu0 0.0
        %380 = vmatprep.subr.mxu0 0.0
        %381 = vmatpush2.msra.mxu0 0.0
        %382 = vmatprep.subr.mxu0 0.0
        %383 = vmatpush2.msra.mxu0 0.0
        %384 = vmatprep.subr.mxu0 0.0
        %385 = vmatpush2.msra.mxu0 0.0
        %386 = vmatprep.subr.mxu0 0.0
        %387 = vmatpush2.msra.mxu0 0.0
        %388 = vmatprep.subr.mxu0 0.0
        %389 = vmatpush2.msra.mxu0 0.0
        %390 = vmatprep.subr.mxu0 0.0
        %391 = vmatpush2.msra.mxu0 0.0
        %392 = vmatprep.subr.mxu0 0.0
        %393 = vmatpush2.msra.mxu0 0.0
        %394 = vmatprep.mubr.f32.mxu0 0.0
        %395 = vmatmul.mubr.f32.gmra.mxu0 %v328
        %v396 = vpop.f32.mrf.mxu0
        %v397 = vadd.f32 %v325, %v396
        %v398 = vpop.f32.mrf.mxu0
        %399 = vdwg.mxu0
        %400 = vst [vmem:[%s215] sm:$0x1] %v397
        %s401 = sand.u32 %s138, 1
        %s402 = scalar_lea.sflag [#allocation4], %s401
        %s403 = sand.u32 %s138, 1
        %s404 = scalar_lea.vmem [#allocation3], %s403
        // Predicated region
        $region41: #{tpu_custom_call.1} parent=39 // pred_check
          %p405 = pneg %p148
        $region42: #{tpu_custom_call.1} parent=39 // pred_check_branch
          %407 = sbr.rel (%p405) target = $region44
        $region43: #{tpu_custom_call.1} parent=39 // pred_region
          %s409 = ssub.s32 16, 16
          %410 = vsyncadd %s402, %s409
          %s411 = smul.addr %s20, 16
          %s412 = scalar_lea.hbm %s5, %s411
          %s414 = sshll.u32 %s404, 4
          %s415 = int_to_ptr.vmem [resolvable:$true] %s414
          %417 = dma.vmem_to_hbm [thread:$0]  %s415, 16, %s412, %s402
        $region44: #{tpu_custom_call.1} parent=39 // pred_fallthru
          _
      $region40: #{tpu_custom_call.1} parent=5 // pred_fallthru
        _
      %p418 = scmp.le.s32.totalorder 2, %s15
      // Predicated region
      $region45: #{tpu_custom_call.1} parent=5 // pred_check
        %p419 = pneg %p418
      $region46: #{tpu_custom_call.1} parent=5 // pred_check_branch
        %421 = sbr.rel (%p419) target = $region48
      $region47: #{tpu_custom_call.1} parent=5 // pred_region
        %s422 = ssub.s32 %s15, 2
        // Predicated region
        $region49: #{tpu_custom_call.1} parent=47 // pred_check
          %p423 = pneg %p154
        $region50: #{tpu_custom_call.1} parent=47 // pred_check_branch
          %425 = sbr.rel (%p423) target = $region52
        $region51: #{tpu_custom_call.1} parent=47 // pred_region
          %s426 = sand.u32 %s139, 1
          %s427 = scalar_lea.sflag [#allocation4], %s426
          %s428 = sand.u32 %s139, 1
          %s429 = scalar_lea.vmem [#allocation3], %s428
          %430 = dma.done %s427, 16
        $region52: #{tpu_custom_call.1} parent=47 // pred_fallthru
          _
      $region48: #{tpu_custom_call.1} parent=5 // pred_fallthru
        _
    $region6: #{tpu_custom_call.1} parent=1 // loop_footer
      %s19 = sadd.s32 1, %s15
    $region7: #{tpu_custom_call.1} parent=1 // loop_footer_branch
      %14 = sbr.rel target = $region3
    $region8: #{tpu_custom_call.1} parent=1 // loop_exit
      _
    %431 = vsyncpa [#allocation4], 1
    %s432 = scalar_lea.sflag [#allocation4], 1
    %433 = vsyncpa %s432, 1

</llo_original>
